<compile_context>
chip_gen: v5e
topology: v5e:2x2
jax: 0.10.0
libtpu: 0.0.40
codegen_flags: <defaults>
</compile_context>

<pallas_src>
import jax
import jax.numpy as jnp
from jax.experimental import pallas as pl
from jax.experimental.pallas import tpu as pltpu


def _round_up(x, m):
    return (x + m - 1) // m * m


def _disc_kernel(obs_ref, act_ref, w1o_ref, w1a_ref, b1_ref,
                 w2_ref, b2_ref, w3_ref, b3_ref, out_ref):
    # Cast activations to bf16 on the VPU (avoids a separate wrapper-side
    # cast pass over the activations in HBM).
    obs = obs_ref[...].astype(jnp.bfloat16)
    act = act_ref[...].astype(jnp.bfloat16)

    # Layer 1: split matmul  obs @ W1[:obs_dim] + act @ W1[obs_dim:]  so the
    # concatenated x is never materialized.  bf16 operands, f32 accumulate.
    h1 = jnp.dot(obs, w1o_ref[...], preferred_element_type=jnp.float32)
    h1 = h1 + jnp.dot(act, w1a_ref[...], preferred_element_type=jnp.float32)
    h1 = jnp.maximum(h1 + b1_ref[...], 0.0)

    # Layer 2: 256x256 MXU matmul (bf16 operands, f32 accumulate) + ReLU.
    h2 = jnp.dot(h1.astype(jnp.bfloat16), w2_ref[...],
                 preferred_element_type=jnp.float32)
    h2 = jnp.maximum(h2 + b2_ref[...], 0.0)

    # Layer 3 (out_features = 1): VPU multiply + XLU lane reduction instead of
    # a 1-column MXU pass; bias read as a scalar from SMEM.
    logits = jnp.sum(h2 * w3_ref[...], axis=-1, keepdims=True) + b3_ref[0, 0]
    prob = jax.nn.sigmoid(logits)                          # (tb, 1) f32

    # Lane-dense store: write the whole tile as one (1, 1, tb) row so the HBM
    # writeback is unmasked vst instead of per-row 1-lane masked stores.
    tb = out_ref.shape[-1]
    out_ref[...] = prob.reshape(1, 1, tb)


def _choose_tile(B, tb_max):
    """Batch tile: multiple of 16, as large as possible, but keep >=2 grid
    steps when the batch allows it (so v7x can shard across its 2 TCs)."""
    b16 = _round_up(max(B, 1), 16)
    if b16 <= 16:
        return 16
    half = _round_up(pl.cdiv(b16, 2), 16)
    return max(16, min(_round_up(tb_max, 16), half))


def discriminator_forward(obs, act, params, tb_max=1024):
    """Pallas forward: obs (B, obs_dim), act (B, act_dim) -> (B, 1) float32."""
    w1, b1, w2, b2, w3_row, b3 = params
    B, obs_dim = obs.shape
    act_dim = act.shape[1]
    h1_dim = w1.shape[1]
    h2_dim = w2.shape[1]
    in_dim = obs_dim + act_dim

    tb = _choose_tile(B, tb_max)
    b_pad = _round_up(B, tb)
    grid_n = b_pad // tb

    if b_pad != B:
        pad = ((0, b_pad - B), (0, 0))
        obs = jnp.pad(obs, pad)
        act = jnp.pad(act, pad)

    # Weight operands in bf16 (tiny one-off casts; weights are VMEM-resident
    # inside the kernel via constant index maps).
    w1o = w1[:obs_dim].astype(jnp.bfloat16)
    w1a = w1[obs_dim:].astype(jnp.bfloat16)
    w2_bf = w2.astype(jnp.bfloat16)

    flops = 2 * b_pad * (in_dim * h1_dim + h1_dim * h2_dim + h2_dim)
    bytes_accessed = (obs.nbytes + act.nbytes + w1o.nbytes + w1a.nbytes
                      + b1.nbytes + w2_bf.nbytes + b2.nbytes
                      + w3_row.nbytes + b3.nbytes + b_pad * 4)

    out = pl.pallas_call(
        _disc_kernel,
        out_shape=jax.ShapeDtypeStruct((grid_n, 1, tb), jnp.float32),
        grid=(grid_n,),
        in_specs=[
            # Activations: tiled over the batch grid axis, streamed from HBM.
            pl.BlockSpec((tb, obs_dim), lambda i: (i, 0)),
            pl.BlockSpec((tb, act_dim), lambda i: (i, 0)),
            # Weights / biases: constant index maps -> loaded once, resident.
            pl.BlockSpec((obs_dim, h1_dim), lambda i: (0, 0)),
            pl.BlockSpec((act_dim, h1_dim), lambda i: (0, 0)),
            pl.BlockSpec((1, h1_dim), lambda i: (0, 0)),
            pl.BlockSpec((h1_dim, h2_dim), lambda i: (0, 0)),
            pl.BlockSpec((1, h2_dim), lambda i: (0, 0)),
            pl.BlockSpec((1, h2_dim), lambda i: (0, 0)),
            # b3 scalar: SMEM, no (8,128)-padded VMEM tile for one value.
            pl.BlockSpec(memory_space=pltpu.MemorySpace.SMEM),
        ],
        out_specs=pl.BlockSpec((1, 1, tb), lambda i: (i, 0, 0)),
        compiler_params=pltpu.CompilerParams(
            dimension_semantics=("parallel",),
            vmem_limit_bytes=32 << 20,
        ),
        cost_estimate=pl.CostEstimate(
            flops=flops,
            transcendentals=2 * b_pad,          # sigmoid = exp + reciprocal
            bytes_accessed=bytes_accessed),
    )(obs, act, w1o, w1a, b1, w2_bf, b2, w3_row, b3)

    # (grid_n, 1, tb) -> (b_pad, 1) (row i*tb + j == out[i, 0, j]) -> (B, 1).
    return out.reshape(b_pad, 1)[:B]


def init_params(key, obs_dim, act_dim, hidden=(256, 256)):
    """Deterministic init mimicking PyTorch nn.Linear (U(-1/sqrt(fan_in), ...))."""
    in_dim = obs_dim + act_dim
    h1, h2 = hidden
    ks = jax.random.split(key, 6)

    def lin(kw, kb, fan_in, fan_out):
        bound = 1.0 / jnp.sqrt(fan_in)
        w = jax.random.uniform(kw, (fan_in, fan_out), jnp.float32, -bound, bound)
        b = jax.random.uniform(kb, (1, fan_out), jnp.float32, -bound, bound)
        return w, b

    w1, b1 = lin(ks[0], ks[1], in_dim, h1)
    w2, b2 = lin(ks[2], ks[3], h1, h2)
    w3, b3 = lin(ks[4], ks[5], h2, 1)
    # Layer-3 weight stored as a (1, h2) row for the in-kernel VPU reduction.
    w3_row = w3.reshape(1, h2)
    return (w1, b1, w2, b2, w3_row, b3)


def discriminator_ref_f32(obs, act, params):
    """Pure-f32 JAX reference (matches the PyTorch module's math)."""
    w1, b1, w2, b2, w3_row, b3 = params
    x = jnp.concatenate([obs, act], axis=-1)
    h = jnp.maximum(x @ w1 + b1, 0.0)
    h = jnp.maximum(h @ w2 + b2, 0.0)
    return jax.nn.sigmoid(jnp.sum(h * w3_row, axis=-1, keepdims=True) + b3)


def discriminator_ref_bf16(obs, act, params):
    """JAX reference following the same bf16-operand / f32-accumulate path."""
    w1, b1, w2, b2, w3_row, b3 = params
    x = jnp.concatenate([obs, act], axis=-1).astype(jnp.bfloat16)
    h = jnp.dot(x, w1.astype(jnp.bfloat16), preferred_element_type=jnp.float32)
    h = jnp.maximum(h + b1, 0.0)
    h = jnp.dot(h.astype(jnp.bfloat16), w2.astype(jnp.bfloat16),
                preferred_element_type=jnp.float32)
    h = jnp.maximum(h + b2, 0.0)
    return jax.nn.sigmoid(jnp.sum(h * w3_row, axis=-1, keepdims=True) + b3)


if __name__ == "__main__":
    # num_uavs = 3  =>  obs_dim = 18, act_dim = 9  (from MultiUAVEnv)
    num_uavs = 3
    obs_dim = num_uavs * 6
    act_dim = num_uavs * 3

    key = jax.random.PRNGKey(0)
    k_obs, k_act, k_params = jax.random.split(key, 3)
    params = init_params(k_params, obs_dim, act_dim, hidden=(256, 256))

    # Small batch (single tile of 16, padded 8 -> 16).
    batch = 8
    obs = jax.random.normal(k_obs, (batch, obs_dim), jnp.float32)
    act = jax.random.uniform(k_act, (batch, act_dim), jnp.float32, -1.0, 1.0)

    out = jax.block_until_ready(discriminator_forward(obs, act, params))
    assert out.shape == (batch, 1), out.shape
    assert jnp.allclose(out, discriminator_ref_bf16(obs, act, params),
                        atol=1e-3, rtol=1e-3)
    assert jnp.allclose(out, discriminator_ref_f32(obs, act, params),
                        atol=2e-2, rtol=2e-2)

    # Larger / ragged batch to exercise the multi-tile grid path
    # (300 -> 2 tiles of 160, two "parallel" grid steps).
    batch2 = 300
    obs2 = jax.random.normal(jax.random.PRNGKey(1), (batch2, obs_dim), jnp.float32)
    act2 = jax.random.uniform(jax.random.PRNGKey(2), (batch2, act_dim),
                              jnp.float32, -1.0, 1.0)
    out2 = jax.block_until_ready(discriminator_forward(obs2, act2, params))
    assert out2.shape == (batch2, 1), out2.shape
    assert jnp.allclose(out2, discriminator_ref_bf16(obs2, act2, params),
                        atol=1e-3, rtol=1e-3)
    assert jnp.allclose(out2, discriminator_ref_f32(obs2, act2, params),
                        atol=2e-2, rtol=2e-2)

    print("KERNEL_OK")
</pallas_src>

<mosaic_0001>
module attributes {stable_mosaic.version = 11 : i64} {
  func.func @_disc_kernel(%arg0: i32, %arg1: memref<16x18xf32, #tpu.memory_space<vmem>>, %arg2: memref<16x9xf32, #tpu.memory_space<vmem>>, %arg3: memref<18x256xbf16, #tpu.memory_space<vmem>>, %arg4: memref<9x256xbf16, #tpu.memory_space<vmem>>, %arg5: memref<1x256xf32, #tpu.memory_space<vmem>>, %arg6: memref<256x256xbf16, #tpu.memory_space<vmem>>, %arg7: memref<1x256xf32, #tpu.memory_space<vmem>>, %arg8: memref<1x256xf32, #tpu.memory_space<vmem>>, %arg9: memref<1x1xf32, #tpu.memory_space<smem>>, %arg10: memref<1x1x16xf32, #tpu.memory_space<vmem>>) attributes {dimension_semantics = [#tpu.dimension_semantics<parallel>], iteration_bounds = array<i64: 1>, scalar_prefetch = 0 : i64, scratch_operands = 0 : i64, tpu.core_type = #tpu.core_type<tc>, window_params = [{transform_indices = @transform_0, window_bounds = array<i64: 16, 18>}, {transform_indices = @transform_1, window_bounds = array<i64: 16, 9>}, {pipeline_mode = #tpu.pipeline_mode<synchronous>, transform_indices = @transform_2, window_bounds = array<i64: 18, 256>}, {pipeline_mode = #tpu.pipeline_mode<synchronous>, transform_indices = @transform_3, window_bounds = array<i64: 9, 256>}, {pipeline_mode = #tpu.pipeline_mode<synchronous>, transform_indices = @transform_4, window_bounds = array<i64: 1, 256>}, {pipeline_mode = #tpu.pipeline_mode<synchronous>, transform_indices = @transform_5, window_bounds = array<i64: 256, 256>}, {pipeline_mode = #tpu.pipeline_mode<synchronous>, transform_indices = @transform_6, window_bounds = array<i64: 1, 256>}, {pipeline_mode = #tpu.pipeline_mode<synchronous>, transform_indices = @transform_7, window_bounds = array<i64: 1, 256>}, {transform_indices = @transform_8, window_bounds = array<i64: 1, 1>}, {transform_indices = @transform_9, window_bounds = array<i64: 1, 1, 16>}]} {
    %c0 = arith.constant 0 : index
    %c0_0 = arith.constant 0 : index
    %0 = vector.load %arg1[%c0, %c0_0] : memref<16x18xf32, #tpu.memory_space<vmem>>, vector<16x18xf32>
    %1 = arith.truncf %0 : vector<16x18xf32> to vector<16x18xbf16>
    %c0_1 = arith.constant 0 : index
    %c0_2 = arith.constant 0 : index
    %2 = vector.load %arg2[%c0_1, %c0_2] : memref<16x9xf32, #tpu.memory_space<vmem>>, vector<16x9xf32>
    %3 = arith.truncf %2 : vector<16x9xf32> to vector<16x9xbf16>
    %c0_3 = arith.constant 0 : index
    %c0_4 = arith.constant 0 : index
    %4 = vector.load %arg3[%c0_3, %c0_4] : memref<18x256xbf16, #tpu.memory_space<vmem>>, vector<18x256xbf16>
    %cst = arith.constant dense<0.000000e+00> : vector<16x256xf32>
    %5 = tpu.matmul %1, %4, %cst {dimension_numbers = #tpu.dot_dimension_numbers<[1], [0], [0], [1], [0, 0, 1, 1], [], []>} : vector<16x18xbf16>, vector<18x256xbf16>, vector<16x256xf32> -> vector<16x256xf32>
    %c0_5 = arith.constant 0 : index
    %c0_6 = arith.constant 0 : index
    %6 = vector.load %arg4[%c0_5, %c0_6] : memref<9x256xbf16, #tpu.memory_space<vmem>>, vector<9x256xbf16>
    %cst_7 = arith.constant dense<0.000000e+00> : vector<16x256xf32>
    %7 = tpu.matmul %3, %6, %cst_7 {dimension_numbers = #tpu.dot_dimension_numbers<[1], [0], [0], [1], [0, 0, 1, 1], [], []>} : vector<16x9xbf16>, vector<9x256xbf16>, vector<16x256xf32> -> vector<16x256xf32>
    %8 = arith.addf %5, %7 : vector<16x256xf32>
    %c0_8 = arith.constant 0 : index
    %c0_9 = arith.constant 0 : index
    %9 = vector.load %arg5[%c0_8, %c0_9] : memref<1x256xf32, #tpu.memory_space<vmem>>, vector<1x256xf32>
    %10 = vector.broadcast %9 : vector<1x256xf32> to vector<16x256xf32>
    %11 = arith.addf %8, %10 : vector<16x256xf32>
    %cst_10 = arith.constant 0.000000e+00 : f32
    %12 = vector.broadcast %cst_10 : f32 to vector<16x256xf32>
    %13 = arith.maximumf %11, %12 : vector<16x256xf32>
    %14 = arith.truncf %13 : vector<16x256xf32> to vector<16x256xbf16>
    %c0_11 = arith.constant 0 : index
    %c0_12 = arith.constant 0 : index
    %15 = vector.load %arg6[%c0_11, %c0_12] : memref<256x256xbf16, #tpu.memory_space<vmem>>, vector<256x256xbf16>
    %cst_13 = arith.constant dense<0.000000e+00> : vector<16x256xf32>
    %16 = tpu.matmul %14, %15, %cst_13 {dimension_numbers = #tpu.dot_dimension_numbers<[1], [0], [0], [1], [0, 0, 1, 1], [], []>} : vector<16x256xbf16>, vector<256x256xbf16>, vector<16x256xf32> -> vector<16x256xf32>
    %c0_14 = arith.constant 0 : index
    %c0_15 = arith.constant 0 : index
    %17 = vector.load %arg7[%c0_14, %c0_15] : memref<1x256xf32, #tpu.memory_space<vmem>>, vector<1x256xf32>
    %18 = vector.broadcast %17 : vector<1x256xf32> to vector<16x256xf32>
    %19 = arith.addf %16, %18 : vector<16x256xf32>
    %cst_16 = arith.constant 0.000000e+00 : f32
    %20 = vector.broadcast %cst_16 : f32 to vector<16x256xf32>
    %21 = arith.maximumf %19, %20 : vector<16x256xf32>
    %c0_17 = arith.constant 0 : index
    %c0_18 = arith.constant 0 : index
    %22 = vector.load %arg8[%c0_17, %c0_18] : memref<1x256xf32, #tpu.memory_space<vmem>>, vector<1x256xf32>
    %23 = vector.broadcast %22 : vector<1x256xf32> to vector<16x256xf32>
    %24 = arith.mulf %21, %23 : vector<16x256xf32>
    %cst_19 = arith.constant dense<0.000000e+00> : vector<16xf32>
    %25 = vector.multi_reduction <add>, %24, %cst_19 [1] : vector<16x256xf32> to vector<16xf32>
    %26 = vector.shape_cast %25 : vector<16xf32> to vector<16x1xf32>
    %c0_20 = arith.constant 0 : index
    %c0_21 = arith.constant 0 : index
    %27 = memref.load %arg9[%c0_20, %c0_21] : memref<1x1xf32, #tpu.memory_space<smem>>
    %28 = vector.broadcast %27 : f32 to vector<16x1xf32>
    %29 = arith.addf %26, %28 : vector<16x1xf32>
    %30 = arith.negf %29 : vector<16x1xf32>
    %31 = math.exp %30 : vector<16x1xf32>
    %cst_22 = arith.constant 1.000000e+00 : f32
    %32 = vector.broadcast %cst_22 : f32 to vector<16x1xf32>
    %33 = arith.addf %32, %31 : vector<16x1xf32>
    %34 = arith.divf %32, %33 : vector<16x1xf32>
    %35 = vector.shape_cast %34 : vector<16x1xf32> to vector<1x1x16xf32>
    %c0_23 = arith.constant 0 : index
    %c0_24 = arith.constant 0 : index
    %c0_25 = arith.constant 0 : index
    %36 = vector.load %arg10[%c0_23, %c0_24, %c0_25] : memref<1x1x16xf32, #tpu.memory_space<vmem>>, vector<1x1x16xf32>
    tpu.vector_store %arg10[%c0_23, %c0_24, %c0_25], %35 {strides = array<i32>} : memref<1x1x16xf32, #tpu.memory_space<vmem>>, vector<1x1x16xf32>,
    return
  }
  func.func @transform_0(%arg0: i32) -> (i32, i32) {
    %c0_i32 = arith.constant 0 : i32
    %c0_i32_0 = arith.constant 0 : i32
    return %arg0, %c0_i32 : i32, i32
  }
  func.func @transform_1(%arg0: i32) -> (i32, i32) {
    %c0_i32 = arith.constant 0 : i32
    %c0_i32_0 = arith.constant 0 : i32
    return %arg0, %c0_i32 : i32, i32
  }
  func.func @transform_2(%arg0: i32) -> (i32, i32) {
    %c0_i32 = arith.constant 0 : i32
    %c0_i32_0 = arith.constant 0 : i32
    %c0_i32_1 = arith.constant 0 : i32
    return %c0_i32, %c0_i32_0 : i32, i32
  }
  func.func @transform_3(%arg0: i32) -> (i32, i32) {
    %c0_i32 = arith.constant 0 : i32
    %c0_i32_0 = arith.constant 0 : i32
    %c0_i32_1 = arith.constant 0 : i32
    return %c0_i32, %c0_i32_0 : i32, i32
  }
  func.func @transform_4(%arg0: i32) -> (i32, i32) {
    %c0_i32 = arith.constant 0 : i32
    %c0_i32_0 = arith.constant 0 : i32
    %c0_i32_1 = arith.constant 0 : i32
    return %c0_i32, %c0_i32_0 : i32, i32
  }
  func.func @transform_5(%arg0: i32) -> (i32, i32) {
    %c0_i32 = arith.constant 0 : i32
    %c0_i32_0 = arith.constant 0 : i32
    %c0_i32_1 = arith.constant 0 : i32
    return %c0_i32, %c0_i32_0 : i32, i32
  }
  func.func @transform_6(%arg0: i32) -> (i32, i32) {
    %c0_i32 = arith.constant 0 : i32
    %c0_i32_0 = arith.constant 0 : i32
    %c0_i32_1 = arith.constant 0 : i32
    return %c0_i32, %c0_i32_0 : i32, i32
  }
  func.func @transform_7(%arg0: i32) -> (i32, i32) {
    %c0_i32 = arith.constant 0 : i32
    %c0_i32_0 = arith.constant 0 : i32
    %c0_i32_1 = arith.constant 0 : i32
    return %c0_i32, %c0_i32_0 : i32, i32
  }
  func.func @transform_8(%arg0: i32) -> (i32, i32) {
    %c0_i32 = arith.constant 0 : i32
    %c0_i32_0 = arith.constant 0 : i32
    %c0_i32_1 = arith.constant 0 : i32
    return %c0_i32, %c0_i32_0 : i32, i32
  }
  func.func @transform_9(%arg0: i32) -> (i32, i32, i32) {
    %c0_i32 = arith.constant 0 : i32
    %c0_i32_0 = arith.constant 0 : i32
    %c0_i32_1 = arith.constant 0 : i32
    return %arg0, %c0_i32, %c0_i32_0 : i32, i32, i32
  }
}

</mosaic_0001>

<llo_original>
// kernel: tpu_custom_call.1
$region0: #{tpu_custom_call.1}
  #allocation0 [shape = 'u32[]', space=smem, size = 0x4, offset = 0x4, fixed_abs, tag = 'smem constant byte address 0x4 - core index']
  #allocation1 [shape = 'u32[72,128]{1,0:T(1,128)}', space=vmem, size = 0x9000, scoped, tag = 'internal scratch']
  #allocation2 [shape = 'f32[1,1]{1,0:T(1,128)S(6)}', space=smem, size = 0x200, scoped, tag = 'scoped memory for tpu_custom_call.1']
  %s0 = inlined_call_operand.hbm [shape: f32[16,18], index: 0, kind: input, shape index: {}]
  %s1 = inlined_call_operand.hbm [shape: f32[16,9], index: 1, kind: input, shape index: {}]
  %s2 = inlined_call_operand.hbm [shape: bf16[18,256], index: 2, kind: input, shape index: {}]
  %s3 = inlined_call_operand.hbm [shape: bf16[9,256], index: 3, kind: input, shape index: {}]
  %s4 = inlined_call_operand.vmem [shape: f32[1,256], index: 4, kind: input, shape index: {}]
  %s5 = inlined_call_operand.hbm [shape: bf16[256,256], index: 5, kind: input, shape index: {}]
  %s6 = inlined_call_operand.vmem [shape: f32[1,256], index: 6, kind: input, shape index: {}]
  %s7 = inlined_call_operand.vmem [shape: f32[1,256], index: 7, kind: input, shape index: {}]
  %s8 = inlined_call_operand.<no memory space> [shape: f32[1,1], index: 8, kind: input, shape index: {}]
  %s9 = inlined_call_operand.hbm [shape: f32[1,1,16], index: 9, kind: output, shape index: {}]
  %s10 = sld [smem:[#allocation0]]
  $region66: #{tpu_custom_call.1} parent=0
    _
  %s12 = ssub.s32 1, %s10
  %s13 = scalar_select 0, %s12, %s10
  %14 = sst [smem:[#allocation2]] %s8
  $region1: #{tpu_custom_call.1} parent=0
    #allocation3 [shape = 'u8[8192]{0}', space=vmem, size = 0x2000, scoped, tag = 'input window, operand 0, single buffered']
    #allocation4 [shape = 's32[1]{0}', space=sflag, size = 0x4, scoped, tag = 'scoped memory for tpu_custom_call.1']
    #allocation5 [shape = 's32[1]{0}', space=sflag, size = 0x4, scoped, tag = 'scoped memory for tpu_custom_call.1']
    #allocation6 [shape = 'u8[8192]{0}', space=vmem, size = 0x2000, scoped, tag = 'input window, operand 1, single buffered']
    #allocation7 [shape = 's32[1]{0}', space=sflag, size = 0x4, scoped, tag = 'scoped memory for tpu_custom_call.1']
    #allocation8 [shape = 'u8[12288]{0}', space=vmem, size = 0x3000, scoped, tag = 'input window, operand 2, single buffered']
    #allocation9 [shape = 'u8[8192]{0}', space=vmem, size = 0x2000, scoped, tag = 'input window, operand 3, single buffered']
    #allocation10 [shape = 's32[1]{0}', space=sflag, size = 0x4, scoped, tag = 'scoped memory for tpu_custom_call.1']
    #allocation11 [shape = 'u8[131072]{0}', space=vmem, size = 0x20000, scoped, tag = 'input window, operand 5, single buffered']
    #allocation12 [shape = 'u8[512]{0}', space=vmem, size = 0x400, scoped, tag = 'output window, operand 0, single buffered']
    %15 = vsyncpa [#allocation4], 0
    %16 = vsyncpa [#allocation7], 0
    %17 = vsyncpa [#allocation10], 0
    %18 = vsyncpa [#allocation5], 0
    // Predicated region
    $region2: #{tpu_custom_call.1} parent=1 // pred_check
      _
    $region3: #{tpu_custom_call.1} parent=1 // pred_check_branch
      %20 = sbr.rel (0) target = $region5
    $region4: #{tpu_custom_call.1} parent=1 // pred_region
      %22 = vsyncadd [#allocation4], 0
      %s23 = sshll.u32 %s0, 4
      %s24 = int_to_ptr.hbm [resolvable:$true] %s23
      %s25 = sshll.u32 [#allocation3], 4
      %s26 = int_to_ptr.vmem [resolvable:$true] %s25
      %31 = dma.hbm_to_vmem [thread:$0]  %s24, 256, %s26, [#allocation4], 128, 128, 8
    $region5: #{tpu_custom_call.1} parent=1 // pred_fallthru
      _
    // Predicated region
    $region6: #{tpu_custom_call.1} parent=1 // pred_check
      _
    $region7: #{tpu_custom_call.1} parent=1 // pred_check_branch
      %33 = sbr.rel (0) target = $region9
    $region8: #{tpu_custom_call.1} parent=1 // pred_region
      %35 = vsyncadd [#allocation7], 0
      %s36 = sshll.u32 %s1, 4
      %s37 = int_to_ptr.hbm [resolvable:$true] %s36
      %s38 = sshll.u32 [#allocation6], 4
      %s39 = int_to_ptr.vmem [resolvable:$true] %s38
      %44 = dma.hbm_to_vmem [thread:$0]  %s37, 256, %s39, [#allocation7], 128, 128, 8
    $region9: #{tpu_custom_call.1} parent=1 // pred_fallthru
      _
    // Predicated region
    $region10: #{tpu_custom_call.1} parent=1 // pred_check
      _
    $region11: #{tpu_custom_call.1} parent=1 // pred_check_branch
      %46 = sbr.rel (0) target = $region13
    $region12: #{tpu_custom_call.1} parent=1 // pred_region
      %48 = vsyncadd [#allocation7], 0
      %s49 = sshll.u32 %s2, 4
      %s50 = int_to_ptr.hbm [resolvable:$true] %s49
      %s51 = sshll.u32 [#allocation8], 4
      %s52 = int_to_ptr.vmem [resolvable:$true] %s51
      %57 = dma.hbm_to_vmem [thread:$0]  %s50, 384, %s52, [#allocation7], 128, 128, 8
    $region13: #{tpu_custom_call.1} parent=1 // pred_fallthru
      _
    // Predicated region
    $region14: #{tpu_custom_call.1} parent=1 // pred_check
      _
    $region15: #{tpu_custom_call.1} parent=1 // pred_check_branch
      %59 = sbr.rel (0) target = $region17
    $region16: #{tpu_custom_call.1} parent=1 // pred_region
      %61 = vsyncadd [#allocation10], 0
      %s62 = sshll.u32 %s3, 4
      %s63 = int_to_ptr.hbm [resolvable:$true] %s62
      %s64 = sshll.u32 [#allocation9], 4
      %s65 = int_to_ptr.vmem [resolvable:$true] %s64
      %70 = dma.hbm_to_vmem [thread:$0]  %s63, 256, %s65, [#allocation10], 128, 128, 8
    $region17: #{tpu_custom_call.1} parent=1 // pred_fallthru
      _
    // Predicated region
    $region18: #{tpu_custom_call.1} parent=1 // pred_check
      _
    $region19: #{tpu_custom_call.1} parent=1 // pred_check_branch
      %72 = sbr.rel (0) target = $region21
    $region20: #{tpu_custom_call.1} parent=1 // pred_region
      _
    $region21: #{tpu_custom_call.1} parent=1 // pred_fallthru
      _
    // Predicated region
    $region22: #{tpu_custom_call.1} parent=1 // pred_check
      _
    $region23: #{tpu_custom_call.1} parent=1 // pred_check_branch
      %74 = sbr.rel (0) target = $region25
    $region24: #{tpu_custom_call.1} parent=1 // pred_region
      %76 = vsyncadd [#allocation10], 0
      %s77 = sshll.u32 %s5, 4
      %s78 = int_to_ptr.hbm [resolvable:$true] %s77
      %s79 = sshll.u32 [#allocation11], 4
      %s80 = int_to_ptr.vmem [resolvable:$true] %s79
      %85 = dma.hbm_to_vmem [thread:$0]  %s78, 4096, %s80, [#allocation10], 128, 128, 8
    $region25: #{tpu_custom_call.1} parent=1 // pred_fallthru
      _
    // Predicated region
    $region26: #{tpu_custom_call.1} parent=1 // pred_check
      _
    $region27: #{tpu_custom_call.1} parent=1 // pred_check_branch
      %87 = sbr.rel (0) target = $region29
    $region28: #{tpu_custom_call.1} parent=1 // pred_region
      _
    $region29: #{tpu_custom_call.1} parent=1 // pred_fallthru
      _
    // Predicated region
    $region30: #{tpu_custom_call.1} parent=1 // pred_check
      _
    $region31: #{tpu_custom_call.1} parent=1 // pred_check_branch
      %89 = sbr.rel (0) target = $region33
    $region32: #{tpu_custom_call.1} parent=1 // pred_region
      _
    $region33: #{tpu_custom_call.1} parent=1 // pred_fallthru
      _
    // Predicated region
    $region34: #{tpu_custom_call.1} parent=1 // pred_check
      _
    $region35: #{tpu_custom_call.1} parent=1 // pred_check_branch
      %91 = sbr.rel (0) target = $region37
    $region36: #{tpu_custom_call.1} parent=1 // pred_region
      _
    $region37: #{tpu_custom_call.1} parent=1 // pred_fallthru
      _
    // Predicated region
    $region38: #{tpu_custom_call.1} parent=1 // pred_check
      _
    $region39: #{tpu_custom_call.1} parent=1 // pred_check_branch
      %93 = sbr.rel (0) target = $region41
    $region40: #{tpu_custom_call.1} parent=1 // pred_region
      %95 = dma.done [#allocation4], 256
    $region41: #{tpu_custom_call.1} parent=1 // pred_fallthru
      _
    // Predicated region
    $region42: #{tpu_custom_call.1} parent=1 // pred_check
      _
    $region43: #{tpu_custom_call.1} parent=1 // pred_check_branch
      %97 = sbr.rel (0) target = $region45
    $region44: #{tpu_custom_call.1} parent=1 // pred_region
      %99 = dma.done [#allocation7], 256
    $region45: #{tpu_custom_call.1} parent=1 // pred_fallthru
      _
    // Predicated region
    $region46: #{tpu_custom_call.1} parent=1 // pred_check
      _
    $region47: #{tpu_custom_call.1} parent=1 // pred_check_branch
      %101 = sbr.rel (0) target = $region49
    $region48: #{tpu_custom_call.1} parent=1 // pred_region
      %103 = dma.done [#allocation7], 384
    $region49: #{tpu_custom_call.1} parent=1 // pred_fallthru
      _
    // Predicated region
    $region50: #{tpu_custom_call.1} parent=1 // pred_check
      _
    $region51: #{tpu_custom_call.1} parent=1 // pred_check_branch
      %105 = sbr.rel (0) target = $region53
    $region52: #{tpu_custom_call.1} parent=1 // pred_region
      %107 = dma.done [#allocation10], 256
    $region53: #{tpu_custom_call.1} parent=1 // pred_fallthru
      _
    // Predicated region
    $region54: #{tpu_custom_call.1} parent=1 // pred_check
      _
    $region55: #{tpu_custom_call.1} parent=1 // pred_check_branch
      %109 = sbr.rel (0) target = $region57
    $region56: #{tpu_custom_call.1} parent=1 // pred_region
      %111 = dma.done [#allocation10], 4096
    $region57: #{tpu_custom_call.1} parent=1 // pred_fallthru
      _
    %v113 = vld [vmem:[#allocation3] sm:$0xff]
    %v114 = vld [vmem:[#allocation3 + $0x8] sm:$0xff]
    %v115 = vpack.c.bf16 %v114, %v113
    %v116 = vld [vmem:[#allocation6] sm:$0xff]
    %v117 = vld [vmem:[#allocation6 + $0x8] sm:$0xff]
    %v118 = vpack.c.bf16 %v117, %v116
    %v119 = vld [vmem:[#allocation8] sm:$0xff]
    %v120 = vld [vmem:[#allocation8 + $0x8] sm:$0xff]
    %v121 = vld [vmem:[#allocation8 + $0x10] sm:$0x11]
    %v122 = vld [vmem:[#allocation9] sm:$0xff]
    %v123 = vld [vmem:[#allocation9 + $0x8] sm:$0x11]
    %v126 = vunpack.c.l.b16 %v122
    %v127 = vunpack.c.h.b16 %v122
    %v128 = vunpack.c.l.b16 %v123
    %v129 = vunpack.c.h.b16 %v123
    %v130 = vpack.c.b16 %v128, %v126
    %v131 = vpack.c.b16 %v129, %v127
    %vm132 = vcmask 72704
    %v134 = vsel %vm132, %v118, 0
    %vm136 = vcmask 1043456
    %vm137 = vcmask 1044480
    %v138 = vsel %vm136, 4294967295, 65535
    %v139 = vsel %vm137, %v138, 0
    %v141 = vand.u32 %v130, %v139
    %v144 = vand.u32 %v131, %v139
    %146 = vmatpush.bf16.msra.mxu0 0
    %147 = vmatpush.bf16.msra.mxu0 0
    %148 = vmatpush.bf16.msra.mxu0 0
    %149 = vmatpush.bf16.msra.mxu0 0
    %150 = vmatpush.bf16.msra.mxu0 0
    %151 = vmatpush.bf16.msra.mxu0 0
    %152 = vmatpush.bf16.msra.mxu0 0
    %153 = vmatpush.bf16.msra.mxu0 %v141
    %154 = vmatmul.bf16.gmra.mxu0 %v134
    %v155 = vpop.f32.mrf.mxu0
    %v156 = vadd.f32 0.0, %v155
    %v157 = vpop.f32.mrf.mxu0
    %v158 = vadd.f32 0.0, %v157
    %159 = vdwg.mxu0
    %160 = vmatpush.bf16.msra.mxu0 0
    %161 = vmatpush.bf16.msra.mxu0 0
    %162 = vmatpush.bf16.msra.mxu0 0
    %163 = vmatpush.bf16.msra.mxu0 0
    %164 = vmatpush.bf16.msra.mxu0 0
    %165 = vmatpush.bf16.msra.mxu0 0
    %166 = vmatpush.bf16.msra.mxu0 0
    %167 = vmatpush.bf16.msra.mxu0 %v144
    %168 = vmatmul.bf16.gmra.mxu0 %v134
    %v169 = vpop.f32.mrf.mxu0
    %v170 = vadd.f32 0.0, %v169
    %v171 = vpop.f32.mrf.mxu0
    %v172 = vadd.f32 0.0, %v171
    %173 = vdwg.mxu0
    %v177 = vunpack.c.l.b16 %v119
    %v178 = vunpack.c.h.b16 %v119
    %v179 = vunpack.c.l.b16 %v120
    %v180 = vunpack.c.h.b16 %v120
    %v181 = vunpack.c.l.b16 %v121
    %v182 = vunpack.c.h.b16 %v121
    %v183 = vpack.c.b16 %v179, %v177
    %v184 = vpack.c.b16 %v180, %v178
    %v185 = vpack.c.b16 %v181, %v181
    %v186 = vpack.c.b16 %v182, %v182
    %vm189 = vcmask 146432
    %v191 = vsel %vm189, %v115, 0
    %vm193 = vcmask 1040384
    %v195 = vsel %vm193, %v185, 0
    %v198 = vsel %vm193, %v186, 0
    %200 = vmatpush.bf16.msra.mxu0 0
    %201 = vmatpush.bf16.msra.mxu0 0
    %202 = vmatpush.bf16.msra.mxu0 0
    %203 = vmatpush.bf16.msra.mxu0 0
    %204 = vmatpush.bf16.msra.mxu0 0
    %205 = vmatpush.bf16.msra.mxu0 0
    %206 = vmatpush.bf16.msra.mxu0 %v195
    %207 = vmatpush.bf16.msra.mxu0 %v183
    %208 = vmatmul.bf16.gmra.mxu0 %v191
    %v209 = vpop.f32.mrf.mxu0
    %v210 = vadd.f32 %v156, %v209
    %v211 = vpop.f32.mrf.mxu0
    %v212 = vadd.f32 %v158, %v211
    %213 = vdwg.mxu0
    %214 = vmatpush.bf16.msra.mxu0 0
    %215 = vmatpush.bf16.msra.mxu0 0
    %216 = vmatpush.bf16.msra.mxu0 0
    %217 = vmatpush.bf16.msra.mxu0 0
    %218 = vmatpush.bf16.msra.mxu0 0
    %219 = vmatpush.bf16.msra.mxu0 0
    %220 = vmatpush.bf16.msra.mxu0 %v198
    %221 = vmatpush.bf16.msra.mxu0 %v184
    %222 = vmatmul.bf16.gmra.mxu0 %v191
    %v223 = vpop.f32.mrf.mxu0
    %v224 = vadd.f32 %v170, %v223
    %v225 = vpop.f32.mrf.mxu0
    %v226 = vadd.f32 %v172, %v225
    %227 = vdwg.mxu0
    %v228 = vld [vmem:[%s4] sm:$0x3]
    %v230 = vperm.slane %v228, 0
    %v231 = vperm.slane %v228, 1
    %v234 = vadd.f32 %v210, %v230
    %v235 = vadd.f32 %v224, %v231
    %v236 = vadd.f32 %v212, %v230
    %v237 = vadd.f32 %v226, %v231
    %v238 = vmax.f32 %v234, 0.0
    %v239 = vmax.f32 %v235, 0.0
    %v240 = vmax.f32 %v236, 0.0
    %v241 = vmax.f32 %v237, 0.0
    %v242 = vpack.c.bf16 %v240, %v238
    %v243 = vpack.c.bf16 %v241, %v239
    %v244 = vld [vmem:[#allocation11] sm:$0xff]
    %v245 = vld [vmem:[#allocation11 + $0x8] sm:$0xff]
    %v246 = vld [vmem:[#allocation11 + $0x10] sm:$0xff]
    %v247 = vld [vmem:[#allocation11 + $0x18] sm:$0xff]
    %v248 = vld [vmem:[#allocation11 + $0x20] sm:$0xff]
    %v249 = vld [vmem:[#allocation11 + $0x28] sm:$0xff]
    %v250 = vld [vmem:[#allocation11 + $0x30] sm:$0xff]
    %v251 = vld [vmem:[#allocation11 + $0x38] sm:$0xff]
    %v252 = vld [vmem:[#allocation11 + $0x40] sm:$0xff]
    %v253 = vld [vmem:[#allocation11 + $0x48] sm:$0xff]
    %v254 = vld [vmem:[#allocation11 + $0x50] sm:$0xff]
    %v255 = vld [vmem:[#allocation11 + $0x58] sm:$0xff]
    %v256 = vld [vmem:[#allocation11 + $0x60] sm:$0xff]
    %v257 = vld [vmem:[#allocation11 + $0x68] sm:$0xff]
    %v258 = vld [vmem:[#allocation11 + $0x70] sm:$0xff]
    %v259 = vld [vmem:[#allocation11 + $0x78] sm:$0xff]
    %v260 = vld [vmem:[#allocation11 + $0x80] sm:$0xff]
    %v261 = vld [vmem:[#allocation11 + $0x88] sm:$0xff]
    %v262 = vld [vmem:[#allocation11 + $0x90] sm:$0xff]
    %v263 = vld [vmem:[#allocation11 + $0x98] sm:$0xff]
    %v264 = vld [vmem:[#allocation11 + $0xa0] sm:$0xff]
    %v265 = vld [vmem:[#allocation11 + $0xa8] sm:$0xff]
    %v266 = vld [vmem:[#allocation11 + $0xb0] sm:$0xff]
    %v267 = vld [vmem:[#allocation11 + $0xb8] sm:$0xff]
    %v268 = vld [vmem:[#allocation11 + $0xc0] sm:$0xff]
    %v269 = vld [vmem:[#allocation11 + $0xc8] sm:$0xff]
    %v270 = vld [vmem:[#allocation11 + $0xd0] sm:$0xff]
    %v271 = vld [vmem:[#allocation11 + $0xd8] sm:$0xff]
    %v272 = vld [vmem:[#allocation11 + $0xe0] sm:$0xff]
    %v273 = vld [vmem:[#allocation11 + $0xe8] sm:$0xff]
    %v274 = vld [vmem:[#allocation11 + $0xf0] sm:$0xff]
    %v275 = vld [vmem:[#allocation11 + $0xf8] sm:$0xff]
    %v276 = vld [vmem:[%s6] sm:$0x3]
    %v278 = vperm.slane %v276, 0
    %v279 = vperm.slane %v276, 1
    %v314 = vunpack.c.l.b16 %v244
    %v315 = vunpack.c.h.b16 %v244
    %v316 = vunpack.c.l.b16 %v245
    %v317 = vunpack.c.h.b16 %v245
    %v318 = vunpack.c.l.b16 %v246
    %v319 = vunpack.c.h.b16 %v246
    %v320 = vunpack.c.l.b16 %v247
    %v321 = vunpack.c.h.b16 %v247
    %v322 = vunpack.c.l.b16 %v248
    %v323 = vunpack.c.h.b16 %v248
    %v324 = vunpack.c.l.b16 %v249
    %v325 = vunpack.c.h.b16 %v249
    %v326 = vunpack.c.l.b16 %v250
    %v327 = vunpack.c.h.b16 %v250
    %v328 = vunpack.c.l.b16 %v251
    %v329 = vunpack.c.h.b16 %v251
    %v330 = vunpack.c.l.b16 %v252
    %v331 = vunpack.c.h.b16 %v252
    %v332 = vunpack.c.l.b16 %v253
    %v333 = vunpack.c.h.b16 %v253
    %v334 = vunpack.c.l.b16 %v254
    %v335 = vunpack.c.h.b16 %v254
    %v336 = vunpack.c.l.b16 %v255
    %v337 = vunpack.c.h.b16 %v255
    %v338 = vunpack.c.l.b16 %v256
    %v339 = vunpack.c.h.b16 %v256
    %v340 = vunpack.c.l.b16 %v257
    %v341 = vunpack.c.h.b16 %v257
    %v342 = vunpack.c.l.b16 %v258
    %v343 = vunpack.c.h.b16 %v258
    %v344 = vunpack.c.l.b16 %v259
    %v345 = vunpack.c.h.b16 %v259
    %v346 = vunpack.c.l.b16 %v260
    %v347 = vunpack.c.h.b16 %v260
    %v348 = vunpack.c.l.b16 %v261
    %v349 = vunpack.c.h.b16 %v261
    %v350 = vunpack.c.l.b16 %v262
    %v351 = vunpack.c.h.b16 %v262
    %v352 = vunpack.c.l.b16 %v263
    %v353 = vunpack.c.h.b16 %v263
    %v354 = vunpack.c.l.b16 %v264
    %v355 = vunpack.c.h.b16 %v264
    %v356 = vunpack.c.l.b16 %v265
    %v357 = vunpack.c.h.b16 %v265
    %v358 = vunpack.c.l.b16 %v266
    %v359 = vunpack.c.h.b16 %v266
    %v360 = vunpack.c.l.b16 %v267
    %v361 = vunpack.c.h.b16 %v267
    %v362 = vunpack.c.l.b16 %v268
    %v363 = vunpack.c.h.b16 %v268
    %v364 = vunpack.c.l.b16 %v269
    %v365 = vunpack.c.h.b16 %v269
    %v366 = vunpack.c.l.b16 %v270
    %v367 = vunpack.c.h.b16 %v270
    %v368 = vunpack.c.l.b16 %v271
    %v369 = vunpack.c.h.b16 %v271
    %v370 = vunpack.c.l.b16 %v272
    %v371 = vunpack.c.h.b16 %v272
    %v372 = vunpack.c.l.b16 %v273
    %v373 = vunpack.c.h.b16 %v273
    %v374 = vunpack.c.l.b16 %v274
    %v375 = vunpack.c.h.b16 %v274
    %v376 = vunpack.c.l.b16 %v275
    %v377 = vunpack.c.h.b16 %v275
    %v378 = vpack.c.b16 %v316, %v314
    %v379 = vpack.c.b16 %v317, %v315
    %v380 = vpack.c.b16 %v320, %v318
    %v381 = vpack.c.b16 %v321, %v319
    %v382 = vpack.c.b16 %v324, %v322
    %v383 = vpack.c.b16 %v325, %v323
    %v384 = vpack.c.b16 %v328, %v326
    %v385 = vpack.c.b16 %v329, %v327
    %v386 = vpack.c.b16 %v332, %v330
    %v387 = vpack.c.b16 %v333, %v331
    %v388 = vpack.c.b16 %v336, %v334
    %v389 = vpack.c.b16 %v337, %v335
    %v390 = vpack.c.b16 %v340, %v338
    %v391 = vpack.c.b16 %v341, %v339
    %v392 = vpack.c.b16 %v344, %v342
    %v393 = vpack.c.b16 %v345, %v343
    %v394 = vpack.c.b16 %v348, %v346
    %v395 = vpack.c.b16 %v349, %v347
    %v396 = vpack.c.b16 %v352, %v350
    %v397 = vpack.c.b16 %v353, %v351
    %v398 = vpack.c.b16 %v356, %v354
    %v399 = vpack.c.b16 %v357, %v355
    %v400 = vpack.c.b16 %v360, %v358
    %v401 = vpack.c.b16 %v361, %v359
    %v402 = vpack.c.b16 %v364, %v362
    %v403 = vpack.c.b16 %v365, %v363
    %v404 = vpack.c.b16 %v368, %v366
    %v405 = vpack.c.b16 %v369, %v367
    %v406 = vpack.c.b16 %v372, %v370
    %v407 = vpack.c.b16 %v373, %v371
    %v408 = vpack.c.b16 %v376, %v374
    %v409 = vpack.c.b16 %v377, %v375
    %442 = vmatpush.bf16.msra.mxu0 %v392
    %443 = vmatpush.bf16.msra.mxu0 %v390
    %444 = vmatpush.bf16.msra.mxu0 %v388
    %445 = vmatpush.bf16.msra.mxu0 %v386
    %446 = vmatpush.bf16.msra.mxu0 %v384
    %447 = vmatpush.bf16.msra.mxu0 %v382
    %448 = vmatpush.bf16.msra.mxu0 %v380
    %449 = vmatpush.bf16.msra.mxu0 %v378
    %450 = vmatmul.bf16.gmra.mxu0 %v242
    %v451 = vpop.f32.mrf.mxu0
    %v452 = vadd.f32 %v278, %v451
    %v453 = vpop.f32.mrf.mxu0
    %v454 = vadd.f32 %v278, %v453
    %455 = vdwg.mxu0
    %456 = vmatpush.bf16.msra.mxu0 %v408
    %457 = vmatpush.bf16.msra.mxu0 %v406
    %458 = vmatpush.bf16.msra.mxu0 %v404
    %459 = vmatpush.bf16.msra.mxu0 %v402
    %460 = vmatpush.bf16.msra.mxu0 %v400
    %461 = vmatpush.bf16.msra.mxu0 %v398
    %462 = vmatpush.bf16.msra.mxu0 %v396
    %463 = vmatpush.bf16.msra.mxu0 %v394
    %464 = vmatmul.bf16.gmra.mxu0 %v243
    %v465 = vpop.f32.mrf.mxu0
    %v466 = vadd.f32 %v452, %v465
    %v467 = vpop.f32.mrf.mxu0
    %v468 = vadd.f32 %v454, %v467
    %469 = vdwg.mxu0
    %470 = vmatpush.bf16.msra.mxu0 %v393
    %471 = vmatpush.bf16.msra.mxu0 %v391
    %472 = vmatpush.bf16.msra.mxu0 %v389
    %473 = vmatpush.bf16.msra.mxu0 %v387
    %474 = vmatpush.bf16.msra.mxu0 %v385
    %475 = vmatpush.bf16.msra.mxu0 %v383
    %476 = vmatpush.bf16.msra.mxu0 %v381
    %477 = vmatpush.bf16.msra.mxu0 %v379
    %478 = vmatmul.bf16.gmra.mxu0 %v242
    %v479 = vpop.f32.mrf.mxu0
    %v480 = vadd.f32 %v279, %v479
    %v481 = vpop.f32.mrf.mxu0
    %v482 = vadd.f32 %v279, %v481
    %483 = vdwg.mxu0
    %484 = vmatpush.bf16.msra.mxu0 %v409
    %485 = vmatpush.bf16.msra.mxu0 %v407
    %486 = vmatpush.bf16.msra.mxu0 %v405
    %487 = vmatpush.bf16.msra.mxu0 %v403
    %488 = vmatpush.bf16.msra.mxu0 %v401
    %489 = vmatpush.bf16.msra.mxu0 %v399
    %490 = vmatpush.bf16.msra.mxu0 %v397
    %491 = vmatpush.bf16.msra.mxu0 %v395
    %492 = vmatmul.bf16.gmra.mxu0 %v243
    %v493 = vpop.f32.mrf.mxu0
    %v494 = vadd.f32 %v480, %v493
    %v495 = vpop.f32.mrf.mxu0
    %v496 = vadd.f32 %v482, %v495
    %497 = vdwg.mxu0
    %v498 = vmax.f32 %v466, 0.0
    %v499 = vmax.f32 %v494, 0.0
    %v500 = vmax.f32 %v468, 0.0
    %v501 = vmax.f32 %v496, 0.0
    %v502 = vld [vmem:[%s7] sm:$0x3]
    %v504 = vperm.slane %v502, 0
    %v505 = vperm.slane %v502, 1
    %v508 = vmul.f32 %v498, %v504
    %v509 = vmul.f32 %v499, %v505
    %v510 = vmul.f32 %v500, %v504
    %v511 = vmul.f32 %v501, %v505
    %v512 = vadd.f32 %v508, %v509
    %513 = vadd.xlane.f32.xlu0 %v512
    %v514 = vpop.xlane.xlu0 %513
    %v515 = vadd.f32 %v510, %v511
    %516 = vadd.xlane.f32.xlu0 %v515
    %v517 = vpop.xlane.xlu0 %516
    %s518 = sld [smem:[#allocation2]]
    %v519 = vstv %s518
    %v520 = vadd.f32 %v514, %v519
    %v521 = vadd.f32 %v517, %v519
    %v522 = vxor.u32 %v520, 2147483648
    %v523 = vxor.u32 %v521, 2147483648
    %v524 = vmul.f32 %v522, 1.442695
    %v525 = vpow.pop %v524
    %v526 = vmul.f32 %v523, 1.442695
    %v527 = vpow.pop %v526
    %v528 = vadd.f32 %v525, 1.0
    %v529 = vadd.f32 %v527, 1.0
    %v530 = vrcp.pop %v528
    %v531 = vmul.f32 %v528, %v530
    %v532 = vsub.f32 1.0, %v531
    %v533 = vmul.f32 %v530, %v532
    %v534 = vadd.f32 %v530, %v533
    %vm535 = vweird.f32 %v528
    %vm536 = vweird.f32 %v530
    %vm537 = vmor %vm535, %vm536
    %v538 = vsel %vm537, %v530, %v534
    %v539 = vand.u32 2147483647, %v528
    %vm540 = vcmp.eq.f32.partialorder %v539, 8.507059e+37
    %v541 = vand.u32 %v528, 2147483648
    %v542 = vor.u32 1.1754944e-38, %v541
    %v543 = vsel %vm540, %v542, %v538
    %v544 = vmul.f32 1.0, %v543
    %v545 = vrcp.pop %v529
    %v546 = vmul.f32 %v529, %v545
    %v547 = vsub.f32 1.0, %v546
    %v548 = vmul.f32 %v545, %v547
    %v549 = vadd.f32 %v545, %v548
    %vm550 = vweird.f32 %v529
    %vm551 = vweird.f32 %v545
    %vm552 = vmor %vm550, %vm551
    %v553 = vsel %vm552, %v545, %v549
    %v554 = vand.u32 2147483647, %v529
    %vm555 = vcmp.eq.f32.partialorder %v554, 8.507059e+37
    %v556 = vand.u32 %v529, 2147483648
    %v557 = vor.u32 1.1754944e-38, %v556
    %v558 = vsel %vm555, %v557, %v553
    %v559 = vmul.f32 1.0, %v558
    %v562 = vlaneseq
    %v563 = vand.u32 %v562, 127
    %v564 = vperm.slane %v544, %v563
    %v565 = vadd.s32 %v563, 4294967288
    %v566 = vperm.slane %v559, %v565
    %vm567 = vcmask 130112
    %v568 = vsel %vm567, %v566, %v564
    %vm570 = vcmask 122880
    %571 = vst.msk [vmem:[#allocation12] sm:$0x1] %vm570, %v568
    // Predicated region
    $region58: #{tpu_custom_call.1} parent=1 // pred_check
      _
    $region59: #{tpu_custom_call.1} parent=1 // pred_check_branch
      %573 = sbr.rel (0) target = $region61
    $region60: #{tpu_custom_call.1} parent=1 // pred_region
      %575 = vsyncadd [#allocation5], 0
      %s577 = sshll.u32 [#allocation12], 4
      %s578 = int_to_ptr.vmem [resolvable:$true] %s577
      %s579 = sshll.u32 %s9, 4
      %s580 = int_to_ptr.hbm [resolvable:$true] %s579
      %582 = dma.vmem_to_hbm [thread:$0]  %s578, 16, %s580, [#allocation5]
    $region61: #{tpu_custom_call.1} parent=1 // pred_fallthru
      _
    // Predicated region
    $region62: #{tpu_custom_call.1} parent=1 // pred_check
      _
    $region63: #{tpu_custom_call.1} parent=1 // pred_check_branch
      %584 = sbr.rel (0) target = $region65
    $region64: #{tpu_custom_call.1} parent=1 // pred_region
      %586 = dma.done [#allocation5], 16
    $region65: #{tpu_custom_call.1} parent=1 // pred_fallthru
      _
    %587 = vsyncpa [#allocation4], 1
    %588 = vsyncpa [#allocation7], 1
    %589 = vsyncpa [#allocation10], 1
    %590 = vsyncpa [#allocation5], 1

</llo_original>
